<compile_context>
chip_gen: v7x
topology: tpu7x:2x2x1
jax: 0.10.0
libtpu: 0.0.40
codegen_flags: <defaults>
</compile_context>

<pallas_src>
from typing import NamedTuple

import jax
import jax.numpy as jnp
from jax.experimental import pallas as pl
from jax.experimental.pallas import tpu as pltpu

H1, H2 = 100, 200          # logical hidden widths (PyTorch module)
H1P, H2P = 128, 256        # lane-padded hidden widths used inside the kernel
BN_EPS = 1e-5

DEFAULT_BLOCK_B = 1024
DEFAULT_BLOCK_K = 2048
VMEM_BUDGET = 36 * 1024 * 1024       # keep the estimate under this
VMEM_LIMIT_BYTES = 48 * 1024 * 1024  # > v5e's 16 MiB default, < v7x's 64 MiB


def _round_up(v, m):
    return ((v + m - 1) // m) * m


# -----------------------------------------------------------------------------
# Kernel bodies
# -----------------------------------------------------------------------------
def _epilogue(h1_pre, b1_ref, w2_ref, b2_ref, w3_ref, b3_ref, o_ref):
    """Layers 2/3 + sigmoid, given the (block_b, H1P) f32 layer-1 pre-act."""
    # Bias + ReLU in f32 (Dropout = identity in eval mode).
    h1 = jnp.maximum(h1_pre + b1_ref[...], 0.0)                     # (tb,128) f32

    # Layer 2: bf16 MXU matmul, f32 epilogue. Zero-padded lanes stay zero.
    h2 = jnp.dot(h1.astype(jnp.bfloat16), w2_ref[...],
                 preferred_element_type=jnp.float32) + b2_ref[...]
    h2 = jnp.maximum(h2, 0.0)                                        # (tb,256) f32

    # Layer 3: Linear(H2, 1). Contract the last dims of (1,H2P) and (tb,H2P) so
    # the per-tile output is a lane-dense (1, block_b) row (no N=1 matmul, no
    # masked partial stores for full tiles).
    z = jax.lax.dot_general(
        w3_ref[...], h2.astype(jnp.bfloat16),
        dimension_numbers=(((1,), (1,)), ((), ())),
        preferred_element_type=jnp.float32) + b3_ref[...]            # (1, tb)

    # Sigmoid: exp + approx reciprocal both ride the EUP slot (cheap).
    o_ref[...] = (pl.reciprocal(1.0 + jnp.exp(-z), approx=True)
                  ).astype(o_ref.dtype)


def sgr_kernel_single_k(x_ref, w1_ref, b1_ref, w2_ref, b2_ref, w3_ref, b3_ref,
                        o_ref):
    """num_k == 1 specialization: no VMEM accumulator round trip."""
    # x streamed as f32 straight from HBM; cast to bf16 only for the MXU.
    h1_pre = jnp.dot(x_ref[...].astype(jnp.bfloat16), w1_ref[...],
                     preferred_element_type=jnp.float32)
    _epilogue(h1_pre, b1_ref, w2_ref, b2_ref, w3_ref, b3_ref, o_ref)


def make_multi_k_kernel(tail_cols, block_k):
    """K-tiled variant: accumulate layer-1 partials in f32 VMEM scratch.

    `tail_cols` = number of valid x columns in the last K block (== block_k
    when D divides evenly). When ragged, out-of-bounds x columns are zeroed
    in-kernel (W1's K padding rows are explicit zeros), so no padded copy of x
    is ever materialized in HBM.
    """
    ragged = tail_cols != block_k

    def kernel(x_ref, w1_ref, b1_ref, w2_ref, b2_ref, w3_ref, b3_ref,
               o_ref, acc_ref):
        k = pl.program_id(1)
        nk = pl.num_programs(1)

        @pl.when(k == 0)
        def _init():
            acc_ref[...] = jnp.zeros_like(acc_ref)

        x = x_ref[...]
        if ragged:
            col = jax.lax.broadcasted_iota(jnp.int32, x.shape, 1)
            keep = jnp.logical_or(k != nk - 1, col < tail_cols)
            x = jnp.where(keep, x, 0.0)

        acc_ref[...] += jnp.dot(x.astype(jnp.bfloat16), w1_ref[...],
                                preferred_element_type=jnp.float32)

        @pl.when(k == nk - 1)
        def _finalize():
            _epilogue(acc_ref[...], b1_ref, w2_ref, b2_ref, w3_ref, b3_ref,
                      o_ref)

    return kernel


# -----------------------------------------------------------------------------
# One-time parameter preparation (hoisted out of the per-call path)
# -----------------------------------------------------------------------------
class SGRPrepared(NamedTuple):
    w1p: jax.Array      # (K_pad, H1P) bf16, BN folded in
    b1p: jax.Array      # (1, H1P)  f32
    w2p: jax.Array      # (H1P, H2P) bf16
    b2p: jax.Array      # (1, H2P)  f32
    w3p: jax.Array      # (1, H2P)  bf16
    b3p: jax.Array      # (1, 1)    f32
    input_dim: int
    max_block_k: int


def prepare_sgr_params(params, *, max_block_k=DEFAULT_BLOCK_K):
    """Fold eval-mode BN into Linear 1 (exact, f32), pad hidden dims to lane
    multiples (100->128, 200->256), pad W1's K dim for K-tiling, cast MXU
    operands to bf16. Call once; reuse the result across forward calls."""
    assert max_block_k % 128 == 0
    gamma, beta, mean, var, w1, b1, w2, b2, w3, b3 = params
    D = w1.shape[0]

    scale = gamma.reshape(1, D) * jax.lax.rsqrt(var.reshape(1, D) + BN_EPS)
    shift = beta.reshape(1, D) - mean.reshape(1, D) * scale
    w1f = w1 * scale.reshape(D, 1)                       # (D, H1)
    b1f = b1.reshape(1, H1) + shift @ w1                 # (1, H1)

    # K padding only needed when the kernel will K-tile; padded rows are zero
    # so in-kernel masking of the ragged x tail alone keeps the matmul exact.
    k_pad = _round_up(D, max_block_k) if D > max_block_k else D

    w1p = jnp.zeros((k_pad, H1P), jnp.bfloat16).at[:D, :H1].set(
        w1f.astype(jnp.bfloat16))
    b1p = jnp.zeros((1, H1P), jnp.float32).at[:, :H1].set(b1f)
    w2p = jnp.zeros((H1P, H2P), jnp.bfloat16).at[:H1, :H2].set(
        w2.astype(jnp.bfloat16))
    b2p = jnp.zeros((1, H2P), jnp.float32).at[:, :H2].set(b2.reshape(1, H2))
    w3p = jnp.zeros((1, H2P), jnp.bfloat16).at[:, :H2].set(
        w3.reshape(1, H2).astype(jnp.bfloat16))
    b3p = b3.reshape(1, 1).astype(jnp.float32)
    return SGRPrepared(w1p, b1p, w2p, b2p, w3p, b3p, int(D), int(max_block_k))


# -----------------------------------------------------------------------------
# Tile selection
# -----------------------------------------------------------------------------
def _vmem_estimate(block_b, block_k):
    x_dbuf = 2 * block_b * block_k * 4          # f32 x, double-buffered
    x_cast = block_b * block_k * 2              # in-kernel bf16 copy of x
    w1_dbuf = 2 * block_k * H1P * 2             # bf16 W1, double-buffered
    acc = block_b * H1P * 4
    epi = block_b * (H1P + H2P) * 6             # h1/h2 f32 + bf16 temporaries
    misc = 2 * (H1P * H2P * 2 + (1 + H1P + H2P) * 4 + block_b * 4) + (1 << 20)
    return x_dbuf + x_cast + w1_dbuf + acc + epi + misc


def _pick_tiles(B, D, max_block_b, max_block_k):
    multi_k = D > max_block_k
    block_k = max_block_k if multi_k else D

    if B <= 128:
        block_b = B                              # single tile = full batch dim
    else:
        # >= 2 batch blocks so the "parallel" axis shards across both v7x TCs.
        n_blocks = max(2, pl.cdiv(B, max_block_b))
        block_b = min(max_block_b, _round_up(pl.cdiv(B, n_blocks), 128))

    # Trim to the VMEM budget (prefer shrinking K, keep lane multiples).
    while _vmem_estimate(block_b, block_k) > VMEM_BUDGET:
        if multi_k and block_k > 512:
            block_k //= 2
        elif block_b > 256:
            block_b = max(256, _round_up(block_b // 2, 128))
        else:
            break

    num_b = pl.cdiv(B, block_b)
    num_k = pl.cdiv(D, block_k) if multi_k else 1
    return block_b, block_k, num_b, num_k


# -----------------------------------------------------------------------------
# Fused forward
# -----------------------------------------------------------------------------
def sgr_forward(x, prep: SGRPrepared, *, max_block_b=DEFAULT_BLOCK_B):
    """Fused SGR forward. x: (B, D) float. Returns (B, 1) f32."""
    B, D = x.shape
    assert D == prep.input_dim, (D, prep.input_dim)
    block_b, block_k, num_b, num_k = _pick_tiles(B, D, max_block_b,
                                                 prep.max_block_k)
    b_pad = num_b * block_b

    if num_k == 1:
        grid = (num_b,)
        in_specs = [
            pl.BlockSpec((block_b, block_k), lambda i: (i, 0)),   # x
            pl.BlockSpec((block_k, H1P), lambda i: (0, 0)),       # W1 (BN-folded)
            pl.BlockSpec((1, H1P), lambda i: (0, 0)),             # b1
            pl.BlockSpec((H1P, H2P), lambda i: (0, 0)),           # W2
            pl.BlockSpec((1, H2P), lambda i: (0, 0)),             # b2
            pl.BlockSpec((1, H2P), lambda i: (0, 0)),             # W3 row
            pl.BlockSpec((1, 1), lambda i: (0, 0)),               # b3
        ]
        out_specs = pl.BlockSpec((1, block_b), lambda i: (0, i))
        scratch_shapes = []
        kernel = sgr_kernel_single_k
        dim_sem = ("parallel",)
    else:
        tail_cols = D - (num_k - 1) * block_k
        grid = (num_b, num_k)
        in_specs = [
            pl.BlockSpec((block_b, block_k), lambda i, k: (i, k)),  # x
            pl.BlockSpec((block_k, H1P), lambda i, k: (k, 0)),      # W1
            pl.BlockSpec((1, H1P), lambda i, k: (0, 0)),            # b1
            pl.BlockSpec((H1P, H2P), lambda i, k: (0, 0)),          # W2
            pl.BlockSpec((1, H2P), lambda i, k: (0, 0)),            # b2
            pl.BlockSpec((1, H2P), lambda i, k: (0, 0)),            # W3 row
            pl.BlockSpec((1, 1), lambda i, k: (0, 0)),              # b3
        ]
        out_specs = pl.BlockSpec((1, block_b), lambda i, k: (0, i))
        scratch_shapes = [pltpu.VMEM((block_b, H1P), jnp.float32)]
        kernel = make_multi_k_kernel(tail_cols, block_k)
        dim_sem = ("parallel", "arbitrary")

    out_row = pl.pallas_call(
        kernel,
        out_shape=jax.ShapeDtypeStruct((1, b_pad), jnp.float32),
        grid_spec=pltpu.PrefetchScalarGridSpec(
            num_scalar_prefetch=0,
            grid=grid,
            in_specs=in_specs,
            out_specs=out_specs,
            scratch_shapes=scratch_shapes,
        ),
        compiler_params=pltpu.CompilerParams(
            dimension_semantics=dim_sem,
            vmem_limit_bytes=VMEM_LIMIT_BYTES),
    )(x, prep.w1p, prep.b1p, prep.w2p, prep.b2p, prep.w3p, prep.b3p)

    # Lane-dense (1, b_pad) row -> (B, 1); padded / ragged lanes sliced off.
    return out_row.reshape(-1)[:B, None]


# -----------------------------------------------------------------------------
# Parameter init + pure-JAX reference
# -----------------------------------------------------------------------------
def init_params(key, input_dim):
    """Deterministic parameter init mirroring the shapes in SGR.__init__."""
    ks = jax.random.split(key, 6)
    gamma = jnp.ones((1, input_dim), jnp.float32)
    beta = jnp.zeros((1, input_dim), jnp.float32)
    mean = 0.1 * jax.random.normal(ks[0], (1, input_dim), jnp.float32)
    var = jnp.abs(1.0 + 0.1 * jax.random.normal(ks[1], (1, input_dim), jnp.float32))
    scale1 = 1.0 / jnp.sqrt(input_dim)
    w1 = scale1 * jax.random.uniform(ks[2], (input_dim, H1), jnp.float32, -1.0, 1.0)
    b1 = jnp.zeros((1, H1), jnp.float32)
    scale2 = 1.0 / jnp.sqrt(H1)
    w2 = scale2 * jax.random.uniform(ks[3], (H1, H2), jnp.float32, -1.0, 1.0)
    b2 = jnp.zeros((1, H2), jnp.float32)
    scale3 = 1.0 / jnp.sqrt(H2)
    w3 = scale3 * jax.random.uniform(ks[4], (H2, 1), jnp.float32, -1.0, 1.0)
    b3 = jnp.zeros((1, 1), jnp.float32)
    return (gamma, beta, mean, var, w1, b1, w2, b2, w3, b3)


def sgr_reference(x, params):
    """Pure-JAX f32 reference (unfused, unpadded) for correctness checks."""
    gamma, beta, mean, var, w1, b1, w2, b2, w3, b3 = params
    h = (x - mean) * jax.lax.rsqrt(var + BN_EPS) * gamma + beta
    h = jnp.maximum(h @ w1 + b1, 0.0)
    h = jnp.maximum(h @ w2 + b2, 0.0)
    return jax.nn.sigmoid(h @ w3 + b3)


if __name__ == "__main__":
    # Test 1: multi-batch-block, single-K path (B=300 -> two 256-row tiles,
    # ragged tail handled by Pallas partial blocks; D=32 -> num_k == 1).
    B, D = 300, 32
    key = jax.random.PRNGKey(0)
    kx, kp = jax.random.split(key)
    x = jax.random.normal(kx, (B, D), jnp.float32)
    params = init_params(kp, D)

    prep = prepare_sgr_params(params)          # one-time (hoisted) param prep
    out = jax.block_until_ready(sgr_forward(x, prep))
    ref = sgr_reference(x, params)

    assert out.shape == (B, 1), out.shape
    max_err = float(jnp.max(jnp.abs(out - ref)))
    assert jnp.allclose(out, ref, atol=3e-2, rtol=1e-2), max_err

    # Test 2: K-tiled path with a ragged K tail (D=300, block_k=128 -> 3 K
    # blocks, tail of 44 columns masked in-kernel; no padded copy of x).
    D2 = 300
    x2 = jax.random.normal(jax.random.PRNGKey(1), (64, D2), jnp.float32)
    params2 = init_params(jax.random.PRNGKey(2), D2)
    prep2 = prepare_sgr_params(params2, max_block_k=128)
    out2 = jax.block_until_ready(sgr_forward(x2, prep2))
    ref2 = sgr_reference(x2, params2)
    assert out2.shape == (64, 1), out2.shape
    max_err2 = float(jnp.max(jnp.abs(out2 - ref2)))
    assert jnp.allclose(out2, ref2, atol=5e-2, rtol=2e-2), max_err2

    print("KERNEL_OK")
</pallas_src>

<mosaic_0001>
module attributes {stable_mosaic.version = 11 : i64} {
  func.func @sgr_kernel_single_k(%arg0: i32, %arg1: memref<256x32xf32, #tpu.memory_space<vmem>>, %arg2: memref<32x128xbf16, #tpu.memory_space<vmem>>, %arg3: memref<1x128xf32, #tpu.memory_space<vmem>>, %arg4: memref<128x256xbf16, #tpu.memory_space<vmem>>, %arg5: memref<1x256xf32, #tpu.memory_space<vmem>>, %arg6: memref<1x256xbf16, #tpu.memory_space<vmem>>, %arg7: memref<1x1xf32, #tpu.memory_space<vmem>>, %arg8: memref<1x256xf32, #tpu.memory_space<vmem>>) attributes {dimension_semantics = [#tpu.dimension_semantics<parallel>], iteration_bounds = array<i64: 2>, scalar_prefetch = 0 : i64, scratch_operands = 0 : i64, tpu.core_type = #tpu.core_type<tc>, window_params = [{transform_indices = @transform_0, window_bounds = array<i64: 256, 32>}, {pipeline_mode = #tpu.pipeline_mode<synchronous>, transform_indices = @transform_1, window_bounds = array<i64: 32, 128>}, {pipeline_mode = #tpu.pipeline_mode<synchronous>, transform_indices = @transform_2, window_bounds = array<i64: 1, 128>}, {pipeline_mode = #tpu.pipeline_mode<synchronous>, transform_indices = @transform_3, window_bounds = array<i64: 128, 256>}, {pipeline_mode = #tpu.pipeline_mode<synchronous>, transform_indices = @transform_4, window_bounds = array<i64: 1, 256>}, {pipeline_mode = #tpu.pipeline_mode<synchronous>, transform_indices = @transform_5, window_bounds = array<i64: 1, 256>}, {pipeline_mode = #tpu.pipeline_mode<synchronous>, transform_indices = @transform_6, window_bounds = array<i64: 1, 1>}, {transform_indices = @transform_7, window_bounds = array<i64: 1, 256>}]} {
    %c0 = arith.constant 0 : index
    %c0_0 = arith.constant 0 : index
    %0 = vector.load %arg1[%c0, %c0_0] : memref<256x32xf32, #tpu.memory_space<vmem>>, vector<256x32xf32>
    %1 = arith.truncf %0 : vector<256x32xf32> to vector<256x32xbf16>
    %c0_1 = arith.constant 0 : index
    %c0_2 = arith.constant 0 : index
    %2 = vector.load %arg2[%c0_1, %c0_2] : memref<32x128xbf16, #tpu.memory_space<vmem>>, vector<32x128xbf16>
    %cst = arith.constant dense<0.000000e+00> : vector<256x128xf32>
    %3 = tpu.matmul %1, %2, %cst {dimension_numbers = #tpu.dot_dimension_numbers<[1], [0], [0], [1], [0, 0, 1, 1], [], []>} : vector<256x32xbf16>, vector<32x128xbf16>, vector<256x128xf32> -> vector<256x128xf32>
    %c0_3 = arith.constant 0 : index
    %c0_4 = arith.constant 0 : index
    %4 = vector.load %arg3[%c0_3, %c0_4] : memref<1x128xf32, #tpu.memory_space<vmem>>, vector<1x128xf32>
    %5 = vector.broadcast %4 : vector<1x128xf32> to vector<256x128xf32>
    %6 = arith.addf %3, %5 : vector<256x128xf32>
    %cst_5 = arith.constant 0.000000e+00 : f32
    %7 = vector.broadcast %cst_5 : f32 to vector<256x128xf32>
    %8 = arith.maximumf %6, %7 : vector<256x128xf32>
    %9 = arith.truncf %8 : vector<256x128xf32> to vector<256x128xbf16>
    %c0_6 = arith.constant 0 : index
    %c0_7 = arith.constant 0 : index
    %10 = vector.load %arg4[%c0_6, %c0_7] : memref<128x256xbf16, #tpu.memory_space<vmem>>, vector<128x256xbf16>
    %cst_8 = arith.constant dense<0.000000e+00> : vector<256x256xf32>
    %11 = tpu.matmul %9, %10, %cst_8 {dimension_numbers = #tpu.dot_dimension_numbers<[1], [0], [0], [1], [0, 0, 1, 1], [], []>} : vector<256x128xbf16>, vector<128x256xbf16>, vector<256x256xf32> -> vector<256x256xf32>
    %c0_9 = arith.constant 0 : index
    %c0_10 = arith.constant 0 : index
    %12 = vector.load %arg5[%c0_9, %c0_10] : memref<1x256xf32, #tpu.memory_space<vmem>>, vector<1x256xf32>
    %13 = vector.broadcast %12 : vector<1x256xf32> to vector<256x256xf32>
    %14 = arith.addf %11, %13 : vector<256x256xf32>
    %cst_11 = arith.constant 0.000000e+00 : f32
    %15 = vector.broadcast %cst_11 : f32 to vector<256x256xf32>
    %16 = arith.maximumf %14, %15 : vector<256x256xf32>
    %c0_12 = arith.constant 0 : index
    %c0_13 = arith.constant 0 : index
    %17 = vector.load %arg6[%c0_12, %c0_13] : memref<1x256xbf16, #tpu.memory_space<vmem>>, vector<1x256xbf16>
    %18 = arith.truncf %16 : vector<256x256xf32> to vector<256x256xbf16>
    %cst_14 = arith.constant dense<0.000000e+00> : vector<1x256xf32>
    %19 = tpu.matmul %17, %18, %cst_14 {dimension_numbers = #tpu.dot_dimension_numbers<[1], [1], [0], [0], [0, 0, 1, 0], [], []>} : vector<1x256xbf16>, vector<256x256xbf16>, vector<1x256xf32> -> vector<1x256xf32>
    %c0_15 = arith.constant 0 : index
    %c0_16 = arith.constant 0 : index
    %20 = vector.load %arg7[%c0_15, %c0_16] : memref<1x1xf32, #tpu.memory_space<vmem>>, vector<1x1xf32>
    %21 = vector.broadcast %20 : vector<1x1xf32> to vector<1x256xf32>
    %22 = arith.addf %19, %21 : vector<1x256xf32>
    %cst_17 = arith.constant 0.000000e+00 : f32
    %23 = vector.broadcast %cst_17 : f32 to vector<1x256xf32>
    %24 = arith.subf %23, %22 : vector<1x256xf32>
    %25 = math.exp %24 : vector<1x256xf32>
    %cst_18 = arith.constant 1.000000e+00 : f32
    %26 = vector.broadcast %cst_18 : f32 to vector<1x256xf32>
    %27 = arith.addf %26, %25 : vector<1x256xf32>
    %28 = tpu.reciprocal %27 {approx = true} : vector<1x256xf32> -> vector<1x256xf32>
    %c0_19 = arith.constant 0 : index
    %c0_20 = arith.constant 0 : index
    %29 = vector.load %arg8[%c0_19, %c0_20] : memref<1x256xf32, #tpu.memory_space<vmem>>, vector<1x256xf32>
    tpu.vector_store %arg8[%c0_19, %c0_20], %28 {strides = array<i32>} : memref<1x256xf32, #tpu.memory_space<vmem>>, vector<1x256xf32>,
    return
  }
  func.func @transform_0(%arg0: i32) -> (i32, i32) {
    %c0_i32 = arith.constant 0 : i32
    %c0_i32_0 = arith.constant 0 : i32
    return %arg0, %c0_i32 : i32, i32
  }
  func.func @transform_1(%arg0: i32) -> (i32, i32) {
    %c0_i32 = arith.constant 0 : i32
    %c0_i32_0 = arith.constant 0 : i32
    %c0_i32_1 = arith.constant 0 : i32
    return %c0_i32, %c0_i32_0 : i32, i32
  }
  func.func @transform_2(%arg0: i32) -> (i32, i32) {
    %c0_i32 = arith.constant 0 : i32
    %c0_i32_0 = arith.constant 0 : i32
    %c0_i32_1 = arith.constant 0 : i32
    return %c0_i32, %c0_i32_0 : i32, i32
  }
  func.func @transform_3(%arg0: i32) -> (i32, i32) {
    %c0_i32 = arith.constant 0 : i32
    %c0_i32_0 = arith.constant 0 : i32
    %c0_i32_1 = arith.constant 0 : i32
    return %c0_i32, %c0_i32_0 : i32, i32
  }
  func.func @transform_4(%arg0: i32) -> (i32, i32) {
    %c0_i32 = arith.constant 0 : i32
    %c0_i32_0 = arith.constant 0 : i32
    %c0_i32_1 = arith.constant 0 : i32
    return %c0_i32, %c0_i32_0 : i32, i32
  }
  func.func @transform_5(%arg0: i32) -> (i32, i32) {
    %c0_i32 = arith.constant 0 : i32
    %c0_i32_0 = arith.constant 0 : i32
    %c0_i32_1 = arith.constant 0 : i32
    return %c0_i32, %c0_i32_0 : i32, i32
  }
  func.func @transform_6(%arg0: i32) -> (i32, i32) {
    %c0_i32 = arith.constant 0 : i32
    %c0_i32_0 = arith.constant 0 : i32
    %c0_i32_1 = arith.constant 0 : i32
    return %c0_i32, %c0_i32_0 : i32, i32
  }
  func.func @transform_7(%arg0: i32) -> (i32, i32) {
    %c0_i32 = arith.constant 0 : i32
    %c0_i32_0 = arith.constant 0 : i32
    return %c0_i32, %arg0 : i32, i32
  }
}

</mosaic_0001>

<llo_original>
// kernel: tpu_custom_call.1
$region0: #{tpu_custom_call.1}
  #allocation0 [shape = 'u32[]', space=smem, size = 0x4, offset = 0x4, fixed_abs, tag = 'smem constant byte address 0x4 - core index']
  #allocation1 [shape = 'u32[144,128]{1,0:T(1,128)}', space=vmem, size = 0x12000, scoped, tag = 'internal scratch']
  #allocation2 [shape = 'f32[1,1]{1,0:T(1,128)S(1)}', space=vmem, size = 0x200, scoped, tag = 'scoped memory for tpu_custom_call.1']
  %s0 = inlined_call_operand.vmem [shape: f32[300,32], index: 0, kind: input, shape index: {}]
  %s1 = inlined_call_operand.vmem [shape: bf16[32,128], index: 1, kind: input, shape index: {}]
  %s2 = inlined_call_operand.vmem [shape: f32[1,128], index: 2, kind: input, shape index: {}]
  %s3 = inlined_call_operand.vmem [shape: bf16[128,256], index: 3, kind: input, shape index: {}]
  %s4 = inlined_call_operand.vmem [shape: f32[1,256], index: 4, kind: input, shape index: {}]
  %s5 = inlined_call_operand.vmem [shape: bf16[1,256], index: 5, kind: input, shape index: {}]
  %s6 = inlined_call_operand.<no memory space> [shape: f32[1,1], index: 6, kind: input, shape index: {}]
  %s7 = inlined_call_operand.hbm [shape: f32[1,512], index: 7, kind: output, shape index: {}]
  %s8 = sld [smem:[#allocation0]]
  $region61: #{tpu_custom_call.1} parent=0
    _
  %s10 = ssub.s32 1, %s8
  %s11 = scalar_select 0, %s10, %s8
  %v12 = vstv %s6
  %13 = vst [vmem:[#allocation2] sm:$0x1] %v12
  $region1: #{tpu_custom_call.1} parent=0
    #allocation3 [shape = 'u8[2048]{0}', space=vmem, size = 0x800, scoped, tag = 'output window, operand 0']
    #allocation4 [shape = 's32[2]{0}', space=sflag, size = 0x8, scoped, tag = 'scoped memory for tpu_custom_call.1']
    %14 = vsyncpa [#allocation4], 0
    %s15 = scalar_lea.sflag [#allocation4], 1
    %16 = vsyncpa %s15, 0
    loop: start=0, step=1, limit=4
    $region2: #{tpu_custom_call.1} parent=1 // loop_pre_header
      _
    $region3: #{tpu_custom_call.1} parent=1 // loop_header
      %s18 = sphi 0, %s22
      %p19 = scmp.ge.s32.totalorder %s18, 4
      %s28 = sphi 0, %s30
      %s31 = sphi 0, %s28
      %s32 = sphi 0, %s31
      %s48 = sphi 0, %s32
      %s52 = sphi 0, %s52
      %s54 = sphi 0, %s52
      %s55 = sphi 0, %s54
      %s69 = sphi 0, %s55
      %s73 = sphi 0, %s73
      %s75 = sphi 0, %s73
      %s76 = sphi 0, %s75
      %s90 = sphi 0, %s76
      %s94 = sphi 0, %s94
      %s96 = sphi 0, %s94
      %s97 = sphi 0, %s96
      %s111 = sphi 0, %s97
      %s115 = sphi 0, %s115
      %s117 = sphi 0, %s115
      %s118 = sphi 0, %s117
      %s132 = sphi 0, %s118
      %s136 = sphi 0, %s136
      %s138 = sphi 0, %s136
      %s139 = sphi 0, %s138
      %s153 = sphi 0, %s139
      %s157 = sphi 0, %s157
      %s159 = sphi 0, %s157
      %s160 = sphi 0, %s159
      %s174 = sphi 0, %s160
      %s180 = sphi 0, %s182
      %s183 = sphi 0, %s180
      %s184 = sphi 0, %s183
      %s200 = sphi 0, %s184
    $region4: #{tpu_custom_call.1} parent=1 // loop_header_branch
      %21 = sbr.rel (%p19) target = $region8
    $region5: #{tpu_custom_call.1} parent=1 // loop_body
      %s23 = ssub.s32 %s18, 1
      %s24 = ssub.s32 %s18, 2
      %s25 = sadd.s32 %s18, 1
      %s26 = ssub.s32 %s18, %s25
      %p27 = scmp.eq.s32.totalorder %s26, 0
      %s29 = sadd.s32 %s28, 1
      %s30 = scalar_select %p27, %s28, %s29
      %p33 = pneg %p27
      %p34 = scmp.eq.s32.totalorder %s18, 1
      %p35 = por %p33, %p34
      %p36 = scmp.ne.s32.totalorder %s28, %s31
      %p37 = scmp.eq.s32.totalorder %s18, 0
      %p38 = por %p36, %p37
      %p39 = scmp.ne.s32.totalorder %s28, %s31
      %p40 = scmp.eq.s32.totalorder %s23, 1
      %p41 = por %p39, %p40
      %p42 = scmp.ne.s32.totalorder %s31, %s32
      %p43 = scmp.eq.s32.totalorder %s23, 0
      %p44 = por %p42, %p43
      %p45 = scmp.ne.s32.totalorder %s31, %s32
      %p46 = scmp.eq.s32.totalorder %s24, 1
      %p47 = por %p45, %p46
      %p49 = scmp.ne.s32.totalorder %s32, %s48
      %p50 = scmp.eq.s32.totalorder %s24, 0
      %p51 = por %p49, %p50
      %s53 = sadd.s32 %s52, 1
      %p56 = scmp.eq.s32.totalorder %s18, 1
      %p57 = scmp.ne.s32.totalorder %s52, %s54
      %p58 = scmp.eq.s32.totalorder %s18, 0
      %p59 = por %p57, %p58
      %p60 = scmp.ne.s32.totalorder %s52, %s54
      %p61 = scmp.eq.s32.totalorder %s23, 1
      %p62 = por %p60, %p61
      %p63 = scmp.ne.s32.totalorder %s54, %s55
      %p64 = scmp.eq.s32.totalorder %s23, 0
      %p65 = por %p63, %p64
      %p66 = scmp.ne.s32.totalorder %s54, %s55
      %p67 = scmp.eq.s32.totalorder %s24, 1
      %p68 = por %p66, %p67
      %p70 = scmp.ne.s32.totalorder %s55, %s69
      %p71 = scmp.eq.s32.totalorder %s24, 0
      %p72 = por %p70, %p71
      %s74 = sadd.s32 %s73, 1
      %p77 = scmp.eq.s32.totalorder %s18, 1
      %p78 = scmp.ne.s32.totalorder %s73, %s75
      %p79 = scmp.eq.s32.totalorder %s18, 0
      %p80 = por %p78, %p79
      %p81 = scmp.ne.s32.totalorder %s73, %s75
      %p82 = scmp.eq.s32.totalorder %s23, 1
      %p83 = por %p81, %p82
      %p84 = scmp.ne.s32.totalorder %s75, %s76
      %p85 = scmp.eq.s32.totalorder %s23, 0
      %p86 = por %p84, %p85
      %p87 = scmp.ne.s32.totalorder %s75, %s76
      %p88 = scmp.eq.s32.totalorder %s24, 1
      %p89 = por %p87, %p88
      %p91 = scmp.ne.s32.totalorder %s76, %s90
      %p92 = scmp.eq.s32.totalorder %s24, 0
      %p93 = por %p91, %p92
      %s95 = sadd.s32 %s94, 1
      %p98 = scmp.eq.s32.totalorder %s18, 1
      %p99 = scmp.ne.s32.totalorder %s94, %s96
      %p100 = scmp.eq.s32.totalorder %s18, 0
      %p101 = por %p99, %p100
      %p102 = scmp.ne.s32.totalorder %s94, %s96
      %p103 = scmp.eq.s32.totalorder %s23, 1
      %p104 = por %p102, %p103
      %p105 = scmp.ne.s32.totalorder %s96, %s97
      %p106 = scmp.eq.s32.totalorder %s23, 0
      %p107 = por %p105, %p106
      %p108 = scmp.ne.s32.totalorder %s96, %s97
      %p109 = scmp.eq.s32.totalorder %s24, 1
      %p110 = por %p108, %p109
      %p112 = scmp.ne.s32.totalorder %s97, %s111
      %p113 = scmp.eq.s32.totalorder %s24, 0
      %p114 = por %p112, %p113
      %s116 = sadd.s32 %s115, 1
      %p119 = scmp.eq.s32.totalorder %s18, 1
      %p120 = scmp.ne.s32.totalorder %s115, %s117
      %p121 = scmp.eq.s32.totalorder %s18, 0
      %p122 = por %p120, %p121
      %p123 = scmp.ne.s32.totalorder %s115, %s117
      %p124 = scmp.eq.s32.totalorder %s23, 1
      %p125 = por %p123, %p124
      %p126 = scmp.ne.s32.totalorder %s117, %s118
      %p127 = scmp.eq.s32.totalorder %s23, 0
      %p128 = por %p126, %p127
      %p129 = scmp.ne.s32.totalorder %s117, %s118
      %p130 = scmp.eq.s32.totalorder %s24, 1
      %p131 = por %p129, %p130
      %p133 = scmp.ne.s32.totalorder %s118, %s132
      %p134 = scmp.eq.s32.totalorder %s24, 0
      %p135 = por %p133, %p134
      %s137 = sadd.s32 %s136, 1
      %p140 = scmp.eq.s32.totalorder %s18, 1
      %p141 = scmp.ne.s32.totalorder %s136, %s138
      %p142 = scmp.eq.s32.totalorder %s18, 0
      %p143 = por %p141, %p142
      %p144 = scmp.ne.s32.totalorder %s136, %s138
      %p145 = scmp.eq.s32.totalorder %s23, 1
      %p146 = por %p144, %p145
      %p147 = scmp.ne.s32.totalorder %s138, %s139
      %p148 = scmp.eq.s32.totalorder %s23, 0
      %p149 = por %p147, %p148
      %p150 = scmp.ne.s32.totalorder %s138, %s139
      %p151 = scmp.eq.s32.totalorder %s24, 1
      %p152 = por %p150, %p151
      %p154 = scmp.ne.s32.totalorder %s139, %s153
      %p155 = scmp.eq.s32.totalorder %s24, 0
      %p156 = por %p154, %p155
      %s158 = sadd.s32 %s157, 1
      %p161 = scmp.eq.s32.totalorder %s18, 1
      %p162 = scmp.ne.s32.totalorder %s157, %s159
      %p163 = scmp.eq.s32.totalorder %s18, 0
      %p164 = por %p162, %p163
      %p165 = scmp.ne.s32.totalorder %s157, %s159
      %p166 = scmp.eq.s32.totalorder %s23, 1
      %p167 = por %p165, %p166
      %p168 = scmp.ne.s32.totalorder %s159, %s160
      %p169 = scmp.eq.s32.totalorder %s23, 0
      %p170 = por %p168, %p169
      %p171 = scmp.ne.s32.totalorder %s159, %s160
      %p172 = scmp.eq.s32.totalorder %s24, 1
      %p173 = por %p171, %p172
      %p175 = scmp.ne.s32.totalorder %s160, %s174
      %p176 = scmp.eq.s32.totalorder %s24, 0
      %p177 = por %p175, %p176
      %s178 = ssub.s32 %s18, %s25
      %p179 = scmp.eq.s32.totalorder %s178, 0
      %s181 = sadd.s32 %s180, 1
      %s182 = scalar_select %p179, %s180, %s181
      %p185 = pneg %p179
      %p186 = scmp.eq.s32.totalorder %s18, 1
      %p187 = por %p185, %p186
      %p188 = scmp.ne.s32.totalorder %s180, %s183
      %p189 = scmp.eq.s32.totalorder %s18, 0
      %p190 = por %p188, %p189
      %p191 = scmp.ne.s32.totalorder %s180, %s183
      %p192 = scmp.eq.s32.totalorder %s23, 1
      %p193 = por %p191, %p192
      %p194 = scmp.ne.s32.totalorder %s183, %s184
      %p195 = scmp.eq.s32.totalorder %s23, 0
      %p196 = por %p194, %p195
      %p197 = scmp.ne.s32.totalorder %s183, %s184
      %p198 = scmp.eq.s32.totalorder %s24, 1
      %p199 = por %p197, %p198
      %p201 = scmp.ne.s32.totalorder %s184, %s200
      %p202 = scmp.eq.s32.totalorder %s24, 0
      %p203 = por %p201, %p202
      %p204 = scmp.le.s32.totalorder 1, %s18
      %p205 = scmp.lt.s32.totalorder %s18, 3
      %p206 = pnand %p204, %p205
      %p207 = pneg %p206
      // Predicated region
      $region9: #{tpu_custom_call.1} parent=5 // pred_check
        _
      $region10: #{tpu_custom_call.1} parent=5 // pred_check_branch
        %209 = sbr.rel (%p206) target = $region12
      $region11: #{tpu_custom_call.1} parent=5 // pred_region
        %s210 = ssub.s32 %s18, 1
        // Predicated region
        $region13: #{tpu_custom_call.1} parent=11 // pred_check
          %p211 = pneg %p65
        $region14: #{tpu_custom_call.1} parent=11 // pred_check_branch
          %213 = sbr.rel (%p211) target = $region16
        $region15: #{tpu_custom_call.1} parent=11 // pred_region
          _
        $region16: #{tpu_custom_call.1} parent=11 // pred_fallthru
          _
        // Predicated region
        $region17: #{tpu_custom_call.1} parent=11 // pred_check
          %p214 = pneg %p86
        $region18: #{tpu_custom_call.1} parent=11 // pred_check_branch
          %216 = sbr.rel (%p214) target = $region20
        $region19: #{tpu_custom_call.1} parent=11 // pred_region
          _
        $region20: #{tpu_custom_call.1} parent=11 // pred_fallthru
          _
        // Predicated region
        $region21: #{tpu_custom_call.1} parent=11 // pred_check
          %p217 = pneg %p107
        $region22: #{tpu_custom_call.1} parent=11 // pred_check_branch
          %219 = sbr.rel (%p217) target = $region24
        $region23: #{tpu_custom_call.1} parent=11 // pred_region
          _
        $region24: #{tpu_custom_call.1} parent=11 // pred_fallthru
          _
        // Predicated region
        $region25: #{tpu_custom_call.1} parent=11 // pred_check
          %p220 = pneg %p128
        $region26: #{tpu_custom_call.1} parent=11 // pred_check_branch
          %222 = sbr.rel (%p220) target = $region28
        $region27: #{tpu_custom_call.1} parent=11 // pred_region
          _
        $region28: #{tpu_custom_call.1} parent=11 // pred_fallthru
          _
        // Predicated region
        $region29: #{tpu_custom_call.1} parent=11 // pred_check
          %p223 = pneg %p149
        $region30: #{tpu_custom_call.1} parent=11 // pred_check_branch
          %225 = sbr.rel (%p223) target = $region32
        $region31: #{tpu_custom_call.1} parent=11 // pred_region
          _
        $region32: #{tpu_custom_call.1} parent=11 // pred_fallthru
          _
        // Predicated region
        $region33: #{tpu_custom_call.1} parent=11 // pred_check
          %p226 = pneg %p170
        $region34: #{tpu_custom_call.1} parent=11 // pred_check_branch
          %228 = sbr.rel (%p226) target = $region36
        $region35: #{tpu_custom_call.1} parent=11 // pred_region
          _
        $region36: #{tpu_custom_call.1} parent=11 // pred_fallthru
          _
      $region12: #{tpu_custom_call.1} parent=5 // pred_fallthru
        _
      %p229 = scmp.lt.s32.totalorder %s18, 2
      // Predicated region
      $region37: #{tpu_custom_call.1} parent=5 // pred_check
        %p230 = pneg %p229
      $region38: #{tpu_custom_call.1} parent=5 // pred_check_branch
        %232 = sbr.rel (%p230) target = $region40
      $region39: #{tpu_custom_call.1} parent=5 // pred_region
        // Predicated region
        $region41: #{tpu_custom_call.1} parent=39 // pred_check
          %p233 = pneg %p38
        $region42: #{tpu_custom_call.1} parent=39 // pred_check_branch
          %235 = sbr.rel (%p233) target = $region44
        $region43: #{tpu_custom_call.1} parent=39 // pred_region
          %s236 = smul.u32 32, %s18
          %s237 = ssub.s32 38, %s236
          %p238 = scmp.lt.s32.totalorder %s237, 32
          %s239 = scalar_select %p238, %s237, 32
          %s240 = smul.u32 128, %s239
          %p241 = scmp.lt.s32.totalorder %s236, 37
          %s242 = scalar_select %p241, %s236, 37
          %s243 = smul.addr %s242, 8
          %s244 = scalar_lea.vmem %s0, %s243
          %s245 = smul.u32 32, %s18
          %s246 = ssub.s32 38, %s245
          %p247 = scmp.lt.s32.totalorder %s246, 32
          %s248 = scalar_select %p247, %s246, 32
          %s249 = smul.u32 128, %s248
        $region44: #{tpu_custom_call.1} parent=39 // pred_fallthru
          _
      $region40: #{tpu_custom_call.1} parent=5 // pred_fallthru
        _
      %p250 = scmp.le.s32.totalorder 1, %s18
      %p251 = scmp.lt.s32.totalorder %s18, 3
      %p252 = pnand %p250, %p251
      %p253 = pneg %p252
      // Predicated region
      $region45: #{tpu_custom_call.1} parent=5 // pred_check
        _
      $region46: #{tpu_custom_call.1} parent=5 // pred_check_branch
        %255 = sbr.rel (%p252) target = $region48
      $region47: #{tpu_custom_call.1} parent=5 // pred_region
        %s256 = ssub.s32 %s18, 1
        %s257 = smul.u32 32, %s23
        %s258 = ssub.s32 38, %s257
        %p259 = scmp.lt.s32.totalorder %s258, 32
        %s260 = scalar_select %p259, %s258, 32
        %s261 = smul.u32 128, %s260
        %p262 = scmp.lt.s32.totalorder %s257, 37
        %s263 = scalar_select %p262, %s257, 37
        %s264 = smul.addr %s263, 8
        %s265 = scalar_lea.vmem %s0, %s264
        %p266 = pneg %p44
        %p267 = pneg %p41
        %p268 = pneg %p65
        %p269 = pneg %p62
        %p270 = pneg %p86
        %p271 = pneg %p83
        %p272 = pneg %p107
        %p273 = pneg %p104
        %p274 = pneg %p128
        %p275 = pneg %p125
        %p276 = pneg %p149
        %p277 = pneg %p146
        %p278 = pneg %p170
        %p279 = pneg %p167
        %p280 = pneg %p196
        %p281 = pneg %p193
        %s282 = sand.u32 %s183, 1
        %s283 = scalar_lea.sflag [#allocation4], %s282
        %s284 = sand.u32 %s183, 1
        %s285 = smul.addr %s284, 2
        %s286 = scalar_lea.vmem [#allocation3], %s285
        %s287 = smul.u32 32, %s23
        %s288 = ssub.s32 38, %s287
        %p289 = scmp.lt.s32.totalorder %s288, 32
        %s290 = scalar_select %p289, %s288, 32
        %s291 = smul.u32 128, %s290
        %p292 = scmp.lt.s32.totalorder %s287, 37
        %s293 = scalar_select %p292, %s287, 37
        %s294 = smul.addr %s293, 8
        %s295 = scalar_lea.vmem %s0, %s294
        %s296 = smul.u32 32, %s23
        %s297 = ssub.s32 38, %s296
        %p298 = scmp.lt.s32.totalorder %s297, 32
        %s299 = scalar_select %p298, %s297, 32
        %s300 = smul.u32 128, %s299
        %s301 = smul.u32 2, %s23
        %v303 = vld [vmem:[%s295] sm:$0xff]
        %v304 = vld [vmem:[%s295 + $0x8] sm:$0xff]
        %v305 = vld [vmem:[%s295 + $0x10] sm:$0xff]
        %v306 = vld [vmem:[%s295 + $0x18] sm:$0xff]
        %v307 = vld [vmem:[%s295 + $0x20] sm:$0xff]
        %v308 = vld [vmem:[%s295 + $0x28] sm:$0xff]
        %v309 = vld [vmem:[%s295 + $0x30] sm:$0xff]
        %v310 = vld [vmem:[%s295 + $0x38] sm:$0xff]
        %v311 = vld [vmem:[%s295 + $0x40] sm:$0xff]
        %v312 = vld [vmem:[%s295 + $0x48] sm:$0xff]
        %v313 = vld [vmem:[%s295 + $0x50] sm:$0xff]
        %v314 = vld [vmem:[%s295 + $0x58] sm:$0xff]
        %v315 = vld [vmem:[%s295 + $0x60] sm:$0xff]
        %v316 = vld [vmem:[%s295 + $0x68] sm:$0xff]
        %v317 = vld [vmem:[%s295 + $0x70] sm:$0xff]
        %v318 = vld [vmem:[%s295 + $0x78] sm:$0xff]
        %v319 = vld [vmem:[%s295 + $0x80] sm:$0xff]
        %v320 = vld [vmem:[%s295 + $0x88] sm:$0xff]
        %v321 = vld [vmem:[%s295 + $0x90] sm:$0xff]
        %v322 = vld [vmem:[%s295 + $0x98] sm:$0xff]
        %v323 = vld [vmem:[%s295 + $0xa0] sm:$0xff]
        %v324 = vld [vmem:[%s295 + $0xa8] sm:$0xff]
        %v325 = vld [vmem:[%s295 + $0xb0] sm:$0xff]
        %v326 = vld [vmem:[%s295 + $0xb8] sm:$0xff]
        %v327 = vld [vmem:[%s295 + $0xc0] sm:$0xff]
        %v328 = vld [vmem:[%s295 + $0xc8] sm:$0xff]
        %v329 = vld [vmem:[%s295 + $0xd0] sm:$0xff]
        %v330 = vld [vmem:[%s295 + $0xd8] sm:$0xff]
        %v331 = vld [vmem:[%s295 + $0xe0] sm:$0xff]
        %v332 = vld [vmem:[%s295 + $0xe8] sm:$0xff]
        %v333 = vld [vmem:[%s295 + $0xf0] sm:$0xff]
        %v334 = vld [vmem:[%s295 + $0xf8] sm:$0xff]
        %v335 = vpack.c.bf16 %v304, %v303
        %v336 = vpack.c.bf16 %v306, %v305
        %v337 = vpack.c.bf16 %v308, %v307
        %v338 = vpack.c.bf16 %v310, %v309
        %v339 = vpack.c.bf16 %v312, %v311
        %v340 = vpack.c.bf16 %v314, %v313
        %v341 = vpack.c.bf16 %v316, %v315
        %v342 = vpack.c.bf16 %v318, %v317
        %v343 = vpack.c.bf16 %v320, %v319
        %v344 = vpack.c.bf16 %v322, %v321
        %v345 = vpack.c.bf16 %v324, %v323
        %v346 = vpack.c.bf16 %v326, %v325
        %v347 = vpack.c.bf16 %v328, %v327
        %v348 = vpack.c.bf16 %v330, %v329
        %v349 = vpack.c.bf16 %v332, %v331
        %v350 = vpack.c.bf16 %v334, %v333
        %v351 = vld [vmem:[%s1] sm:$0xf]
        %v352 = vld [vmem:[%s1 + $0x4] sm:$0xf]
        %v353 = vld [vmem:[%s1 + $0x8] sm:$0xf]
        %v354 = vld [vmem:[%s1 + $0xc] sm:$0xf]
        %v355 = vld [vmem:[%s2] sm:$0x1]
        %v357 = vlaneseq
        %v358 = vshrl.u32 %v357, 7
        %v359 = vsub.s32 0, %v358
        %v360 = vrot.slane %v355, %v359
        %v366 = vunpack.c.l.b16 %v351
        %v367 = vunpack.c.l.b16 %v352
        %v368 = vunpack.c.l.b16 %v353
        %v369 = vunpack.c.l.b16 %v354
        %v370 = vpack.c.b16 %v367, %v366
        %v371 = vpack.c.b16 %v369, %v368
        %vm374 = vcmask 261120
        %v376 = vsel %vm374, %v335, 0
        %v379 = vsel %vm374, %v336, 0
        %v382 = vsel %vm374, %v337, 0
        %v385 = vsel %vm374, %v338, 0
        %v388 = vsel %vm374, %v339, 0
        %v391 = vsel %vm374, %v340, 0
        %v394 = vsel %vm374, %v341, 0
        %v397 = vsel %vm374, %v342, 0
        %v400 = vsel %vm374, %v343, 0
        %v403 = vsel %vm374, %v344, 0
        %v406 = vsel %vm374, %v345, 0
        %v409 = vsel %vm374, %v346, 0
        %v412 = vsel %vm374, %v347, 0
        %v415 = vsel %vm374, %v348, 0
        %v418 = vsel %vm374, %v349, 0
        %v421 = vsel %vm374, %v350, 0
        %423 = vmatprep.subr.bf16.mxu0 0
        %424 = vmatpush1.bf16.msra.mxu0 %v370
        %425 = vmatprep.subr.bf16.mxu0 0
        %426 = vmatpush1.bf16.msra.mxu0 %v371
        %427 = vmatprep.subr.bf16.mxu0 0
        %428 = vmatpush1.bf16.msra.mxu0 0
        %429 = vmatprep.subr.bf16.mxu0 0
        %430 = vmatpush1.bf16.msra.mxu0 0
        %431 = vmatprep.subr.bf16.mxu0 0
        %432 = vmatpush1.bf16.msra.mxu0 0
        %433 = vmatprep.subr.bf16.mxu0 0
        %434 = vmatpush1.bf16.msra.mxu0 0
        %435 = vmatprep.subr.bf16.mxu0 0
        %436 = vmatpush1.bf16.msra.mxu0 0
        %437 = vmatprep.subr.bf16.mxu0 0
        %438 = vmatpush1.bf16.msra.mxu0 0
        %439 = vmatprep.subr.bf16.mxu0 0
        %440 = vmatpush1.bf16.msra.mxu0 0
        %441 = vmatprep.subr.bf16.mxu0 0
        %442 = vmatpush1.bf16.msra.mxu0 0
        %443 = vmatprep.subr.bf16.mxu0 0
        %444 = vmatpush1.bf16.msra.mxu0 0
        %445 = vmatprep.subr.bf16.mxu0 0
        %446 = vmatpush1.bf16.msra.mxu0 0
        %447 = vmatprep.subr.bf16.mxu0 0
        %448 = vmatpush1.bf16.msra.mxu0 0
        %449 = vmatprep.subr.bf16.mxu0 0
        %450 = vmatpush1.bf16.msra.mxu0 0
        %451 = vmatprep.subr.bf16.mxu0 0
        %452 = vmatpush1.bf16.msra.mxu0 0
        %453 = vmatprep.subr.bf16.mxu0 0
        %454 = vmatpush1.bf16.msra.mxu0 0
        %455 = vmatprep.mubr.bf16.mxu0 0
        %456 = vmatmul.mubr.bf16.gmra.mrb[0].mxu0 %v376
        %v457 = vpop.f32.mrb[0].mxu0
        %v458 = vadd.f32 %v360, %v457
        %v459 = vpop.f32.mrb[0].mxu0
        %v460 = vpop.f32.mrb[0].mxu0
        %v461 = vadd.f32 %v360, %v460
        %v462 = vpop.f32.mrb[0].mxu0
        %463 = vmatprep.mubr.bf16.mxu0 0
        %464 = vmatmul.mubr.bf16.gmra.mrb[0].mxu0 %v379
        %v465 = vpop.f32.mrb[0].mxu0
        %v466 = vadd.f32 %v360, %v465
        %v467 = vpop.f32.mrb[0].mxu0
        %v468 = vpop.f32.mrb[0].mxu0
        %v469 = vadd.f32 %v360, %v468
        %v470 = vpop.f32.mrb[0].mxu0
        %471 = vmatprep.mubr.bf16.mxu0 0
        %472 = vmatmul.mubr.bf16.gmra.mrb[0].mxu0 %v382
        %v473 = vpop.f32.mrb[0].mxu0
        %v474 = vadd.f32 %v360, %v473
        %v475 = vpop.f32.mrb[0].mxu0
        %v476 = vpop.f32.mrb[0].mxu0
        %v477 = vadd.f32 %v360, %v476
        %v478 = vpop.f32.mrb[0].mxu0
        %479 = vmatprep.mubr.bf16.mxu0 0
        %480 = vmatmul.mubr.bf16.gmra.mrb[0].mxu0 %v385
        %v481 = vpop.f32.mrb[0].mxu0
        %v482 = vadd.f32 %v360, %v481
        %v483 = vpop.f32.mrb[0].mxu0
        %v484 = vpop.f32.mrb[0].mxu0
        %v485 = vadd.f32 %v360, %v484
        %v486 = vpop.f32.mrb[0].mxu0
        %487 = vmatprep.mubr.bf16.mxu0 0
        %488 = vmatmul.mubr.bf16.gmra.mrb[0].mxu0 %v388
        %v489 = vpop.f32.mrb[0].mxu0
        %v490 = vadd.f32 %v360, %v489
        %v491 = vpop.f32.mrb[0].mxu0
        %v492 = vpop.f32.mrb[0].mxu0
        %v493 = vadd.f32 %v360, %v492
        %v494 = vpop.f32.mrb[0].mxu0
        %495 = vmatprep.mubr.bf16.mxu0 0
        %496 = vmatmul.mubr.bf16.gmra.mrb[0].mxu0 %v391
        %v497 = vpop.f32.mrb[0].mxu0
        %v498 = vadd.f32 %v360, %v497
        %v499 = vpop.f32.mrb[0].mxu0
        %v500 = vpop.f32.mrb[0].mxu0
        %v501 = vadd.f32 %v360, %v500
        %v502 = vpop.f32.mrb[0].mxu0
        %503 = vmatprep.mubr.bf16.mxu0 0
        %504 = vmatmul.mubr.bf16.gmra.mrb[0].mxu0 %v394
        %v505 = vpop.f32.mrb[0].mxu0
        %v506 = vadd.f32 %v360, %v505
        %v507 = vpop.f32.mrb[0].mxu0
        %v508 = vpop.f32.mrb[0].mxu0
        %v509 = vadd.f32 %v360, %v508
        %v510 = vpop.f32.mrb[0].mxu0
        %511 = vmatprep.mubr.bf16.mxu0 0
        %512 = vmatmul.mubr.bf16.gmra.mrb[0].mxu0 %v397
        %v513 = vpop.f32.mrb[0].mxu0
        %v514 = vadd.f32 %v360, %v513
        %v515 = vpop.f32.mrb[0].mxu0
        %v516 = vpop.f32.mrb[0].mxu0
        %v517 = vadd.f32 %v360, %v516
        %v518 = vpop.f32.mrb[0].mxu0
        %519 = vmatprep.mubr.bf16.mxu0 0
        %520 = vmatmul.mubr.bf16.gmra.mrb[0].mxu0 %v400
        %v521 = vpop.f32.mrb[0].mxu0
        %v522 = vadd.f32 %v360, %v521
        %v523 = vpop.f32.mrb[0].mxu0
        %v524 = vpop.f32.mrb[0].mxu0
        %v525 = vadd.f32 %v360, %v524
        %v526 = vpop.f32.mrb[0].mxu0
        %527 = vmatprep.mubr.bf16.mxu0 0
        %528 = vmatmul.mubr.bf16.gmra.mrb[0].mxu0 %v403
        %v529 = vpop.f32.mrb[0].mxu0
        %v530 = vadd.f32 %v360, %v529
        %v531 = vpop.f32.mrb[0].mxu0
        %v532 = vpop.f32.mrb[0].mxu0
        %v533 = vadd.f32 %v360, %v532
        %v534 = vpop.f32.mrb[0].mxu0
        %535 = vmatprep.mubr.bf16.mxu0 0
        %536 = vmatmul.mubr.bf16.gmra.mrb[0].mxu0 %v406
        %v537 = vpop.f32.mrb[0].mxu0
        %v538 = vadd.f32 %v360, %v537
        %v539 = vpop.f32.mrb[0].mxu0
        %v540 = vpop.f32.mrb[0].mxu0
        %v541 = vadd.f32 %v360, %v540
        %v542 = vpop.f32.mrb[0].mxu0
        %543 = vmatprep.mubr.bf16.mxu0 0
        %544 = vmatmul.mubr.bf16.gmra.mrb[0].mxu0 %v409
        %v545 = vpop.f32.mrb[0].mxu0
        %v546 = vadd.f32 %v360, %v545
        %v547 = vpop.f32.mrb[0].mxu0
        %v548 = vpop.f32.mrb[0].mxu0
        %v549 = vadd.f32 %v360, %v548
        %v550 = vpop.f32.mrb[0].mxu0
        %551 = vmatprep.mubr.bf16.mxu0 0
        %552 = vmatmul.mubr.bf16.gmra.mrb[0].mxu0 %v412
        %v553 = vpop.f32.mrb[0].mxu0
        %v554 = vadd.f32 %v360, %v553
        %v555 = vpop.f32.mrb[0].mxu0
        %v556 = vpop.f32.mrb[0].mxu0
        %v557 = vadd.f32 %v360, %v556
        %v558 = vpop.f32.mrb[0].mxu0
        %559 = vmatprep.mubr.bf16.mxu0 0
        %560 = vmatmul.mubr.bf16.gmra.mrb[0].mxu0 %v415
        %v561 = vpop.f32.mrb[0].mxu0
        %v562 = vadd.f32 %v360, %v561
        %v563 = vpop.f32.mrb[0].mxu0
        %v564 = vpop.f32.mrb[0].mxu0
        %v565 = vadd.f32 %v360, %v564
        %v566 = vpop.f32.mrb[0].mxu0
        %567 = vmatprep.mubr.bf16.mxu0 0
        %568 = vmatmul.mubr.bf16.gmra.mrb[0].mxu0 %v418
        %v569 = vpop.f32.mrb[0].mxu0
        %v570 = vadd.f32 %v360, %v569
        %v571 = vpop.f32.mrb[0].mxu0
        %v572 = vpop.f32.mrb[0].mxu0
        %v573 = vadd.f32 %v360, %v572
        %v574 = vpop.f32.mrb[0].mxu0
        %575 = vmatprep.mubr.bf16.mxu0 0
        %576 = vmatmul.mubr.bf16.gmra.mrb[0].mxu0 %v421
        %v577 = vpop.f32.mrb[0].mxu0
        %v578 = vadd.f32 %v360, %v577
        %v579 = vpop.f32.mrb[0].mxu0
        %v580 = vpop.f32.mrb[0].mxu0
        %v581 = vadd.f32 %v360, %v580
        %v582 = vpop.f32.mrb[0].mxu0
        %583 = vdwg.mxu0
        %v584 = vmax.f32 %v458, 0.0
        %v585 = vmax.f32 %v461, 0.0
        %v586 = vmax.f32 %v466, 0.0
        %v587 = vmax.f32 %v469, 0.0
        %v588 = vmax.f32 %v474, 0.0
        %v589 = vmax.f32 %v477, 0.0
        %v590 = vmax.f32 %v482, 0.0
        %v591 = vmax.f32 %v485, 0.0
        %v592 = vmax.f32 %v490, 0.0
        %v593 = vmax.f32 %v493, 0.0
        %v594 = vmax.f32 %v498, 0.0
        %v595 = vmax.f32 %v501, 0.0
        %v596 = vmax.f32 %v506, 0.0
        %v597 = vmax.f32 %v509, 0.0
        %v598 = vmax.f32 %v514, 0.0
        %v599 = vmax.f32 %v517, 0.0
        %v600 = vmax.f32 %v522, 0.0
        %v601 = vmax.f32 %v525, 0.0
        %v602 = vmax.f32 %v530, 0.0
        %v603 = vmax.f32 %v533, 0.0
        %v604 = vmax.f32 %v538, 0.0
        %v605 = vmax.f32 %v541, 0.0
        %v606 = vmax.f32 %v546, 0.0
        %v607 = vmax.f32 %v549, 0.0
        %v608 = vmax.f32 %v554, 0.0
        %v609 = vmax.f32 %v557, 0.0
        %v610 = vmax.f32 %v562, 0.0
        %v611 = vmax.f32 %v565, 0.0
        %v612 = vmax.f32 %v570, 0.0
        %v613 = vmax.f32 %v573, 0.0
        %v614 = vmax.f32 %v578, 0.0
        %v615 = vmax.f32 %v581, 0.0
        %v616 = vpack.c.bf16 %v585, %v584
        %v617 = vpack.c.bf16 %v587, %v586
        %v618 = vpack.c.bf16 %v589, %v588
        %v619 = vpack.c.bf16 %v591, %v590
        %v620 = vpack.c.bf16 %v593, %v592
        %v621 = vpack.c.bf16 %v595, %v594
        %v622 = vpack.c.bf16 %v597, %v596
        %v623 = vpack.c.bf16 %v599, %v598
        %v624 = vpack.c.bf16 %v601, %v600
        %v625 = vpack.c.bf16 %v603, %v602
        %v626 = vpack.c.bf16 %v605, %v604
        %v627 = vpack.c.bf16 %v607, %v606
        %v628 = vpack.c.bf16 %v609, %v608
        %v629 = vpack.c.bf16 %v611, %v610
        %v630 = vpack.c.bf16 %v613, %v612
        %v631 = vpack.c.bf16 %v615, %v614
        %v632 = vld [vmem:[%s3] sm:$0xff]
        %v633 = vld [vmem:[%s3 + $0x8] sm:$0xff]
        %v634 = vld [vmem:[%s3 + $0x10] sm:$0xff]
        %v635 = vld [vmem:[%s3 + $0x18] sm:$0xff]
        %v636 = vld [vmem:[%s3 + $0x20] sm:$0xff]
        %v637 = vld [vmem:[%s3 + $0x28] sm:$0xff]
        %v638 = vld [vmem:[%s3 + $0x30] sm:$0xff]
        %v639 = vld [vmem:[%s3 + $0x38] sm:$0xff]
        %v640 = vld [vmem:[%s3 + $0x40] sm:$0xff]
        %v641 = vld [vmem:[%s3 + $0x48] sm:$0xff]
        %v642 = vld [vmem:[%s3 + $0x50] sm:$0xff]
        %v643 = vld [vmem:[%s3 + $0x58] sm:$0xff]
        %v644 = vld [vmem:[%s3 + $0x60] sm:$0xff]
        %v645 = vld [vmem:[%s3 + $0x68] sm:$0xff]
        %v646 = vld [vmem:[%s3 + $0x70] sm:$0xff]
        %v647 = vld [vmem:[%s3 + $0x78] sm:$0xff]
        %v648 = vld [vmem:[%s4] sm:$0x3]
        %v650 = vlaneseq
        %v651 = vshrl.u32 %v650, 7
        %v652 = vsub.s32 0, %v651
        %v653 = vrot.slane %v648, %v652
        %v654 = vlaneseq
        %v655 = vshrl.u32 %v654, 7
        %v656 = vsub.s32 1, %v655
        %v657 = vrot.slane %v648, %v656
        %v676 = vunpack.c.l.b16 %v632
        %v677 = vunpack.c.h.b16 %v632
        %v678 = vunpack.c.l.b16 %v633
        %v679 = vunpack.c.h.b16 %v633
        %v680 = vunpack.c.l.b16 %v634
        %v681 = vunpack.c.h.b16 %v634
        %v682 = vunpack.c.l.b16 %v635
        %v683 = vunpack.c.h.b16 %v635
        %v684 = vunpack.c.l.b16 %v636
        %v685 = vunpack.c.h.b16 %v636
        %v686 = vunpack.c.l.b16 %v637
        %v687 = vunpack.c.h.b16 %v637
        %v688 = vunpack.c.l.b16 %v638
        %v689 = vunpack.c.h.b16 %v638
        %v690 = vunpack.c.l.b16 %v639
        %v691 = vunpack.c.h.b16 %v639
        %v692 = vunpack.c.l.b16 %v640
        %v693 = vunpack.c.h.b16 %v640
        %v694 = vunpack.c.l.b16 %v641
        %v695 = vunpack.c.h.b16 %v641
        %v696 = vunpack.c.l.b16 %v642
        %v697 = vunpack.c.h.b16 %v642
        %v698 = vunpack.c.l.b16 %v643
        %v699 = vunpack.c.h.b16 %v643
        %v700 = vunpack.c.l.b16 %v644
        %v701 = vunpack.c.h.b16 %v644
        %v702 = vunpack.c.l.b16 %v645
        %v703 = vunpack.c.h.b16 %v645
        %v704 = vunpack.c.l.b16 %v646
        %v705 = vunpack.c.h.b16 %v646
        %v706 = vunpack.c.l.b16 %v647
        %v707 = vunpack.c.h.b16 %v647
        %v708 = vpack.c.b16 %v678, %v676
        %v709 = vpack.c.b16 %v679, %v677
        %v710 = vpack.c.b16 %v682, %v680
        %v711 = vpack.c.b16 %v683, %v681
        %v712 = vpack.c.b16 %v686, %v684
        %v713 = vpack.c.b16 %v687, %v685
        %v714 = vpack.c.b16 %v690, %v688
        %v715 = vpack.c.b16 %v691, %v689
        %v716 = vpack.c.b16 %v694, %v692
        %v717 = vpack.c.b16 %v695, %v693
        %v718 = vpack.c.b16 %v698, %v696
        %v719 = vpack.c.b16 %v699, %v697
        %v720 = vpack.c.b16 %v702, %v700
        %v721 = vpack.c.b16 %v703, %v701
        %v722 = vpack.c.b16 %v706, %v704
        %v723 = vpack.c.b16 %v707, %v705
        %740 = vmatprep.subr.bf16.mxu0 %v709
        %741 = vmatpush1.bf16.msra.mxu0 %v708
        %742 = vmatprep.subr.bf16.mxu0 %v711
        %743 = vmatpush1.bf16.msra.mxu0 %v710
        %744 = vmatprep.subr.bf16.mxu0 %v713
        %745 = vmatpush1.bf16.msra.mxu0 %v712
        %746 = vmatprep.subr.bf16.mxu0 %v715
        %747 = vmatpush1.bf16.msra.mxu0 %v714
        %748 = vmatprep.subr.bf16.mxu0 %v717
        %749 = vmatpush1.bf16.msra.mxu0 %v716
        %750 = vmatprep.subr.bf16.mxu0 %v719
        %751 = vmatpush1.bf16.msra.mxu0 %v718
        %752 = vmatprep.subr.bf16.mxu0 %v721
        %753 = vmatpush1.bf16.msra.mxu0 %v720
        %754 = vmatprep.subr.bf16.mxu0 %v723
        %755 = vmatpush1.bf16.msra.mxu0 %v722
        %756 = vmatprep.subr.bf16.mxu0 0
        %757 = vmatpush1.bf16.msra.mxu0 0
        %758 = vmatprep.subr.bf16.mxu0 0
        %759 = vmatpush1.bf16.msra.mxu0 0
        %760 = vmatprep.subr.bf16.mxu0 0
        %761 = vmatpush1.bf16.msra.mxu0 0
        %762 = vmatprep.subr.bf16.mxu0 0
        %763 = vmatpush1.bf16.msra.mxu0 0
        %764 = vmatprep.subr.bf16.mxu0 0
        %765 = vmatpush1.bf16.msra.mxu0 0
        %766 = vmatprep.subr.bf16.mxu0 0
        %767 = vmatpush1.bf16.msra.mxu0 0
        %768 = vmatprep.subr.bf16.mxu0 0
        %769 = vmatpush1.bf16.msra.mxu0 0
        %770 = vmatprep.subr.bf16.mxu0 0
        %771 = vmatpush1.bf16.msra.mxu0 0
        %772 = vmatprep.mubr.bf16.mxu0 0
        %773 = vmatmul.mubr.bf16.gmra.mrb[0].mxu0 %v616
        %v774 = vpop.f32.mrb[0].mxu0
        %v775 = vadd.f32 %v653, %v774
        %v776 = vpop.f32.mrb[0].mxu0
        %v777 = vadd.f32 %v657, %v776
        %v778 = vpop.f32.mrb[0].mxu0
        %v779 = vadd.f32 %v653, %v778
        %v780 = vpop.f32.mrb[0].mxu0
        %v781 = vadd.f32 %v657, %v780
        %782 = vmatprep.mubr.bf16.mxu0 0
        %783 = vmatmul.mubr.bf16.gmra.mrb[0].mxu0 %v617
        %v784 = vpop.f32.mrb[0].mxu0
        %v785 = vadd.f32 %v653, %v784
        %v786 = vpop.f32.mrb[0].mxu0
        %v787 = vadd.f32 %v657, %v786
        %v788 = vpop.f32.mrb[0].mxu0
        %v789 = vadd.f32 %v653, %v788
        %v790 = vpop.f32.mrb[0].mxu0
        %v791 = vadd.f32 %v657, %v790
        %792 = vmatprep.mubr.bf16.mxu0 0
        %793 = vmatmul.mubr.bf16.gmra.mrb[0].mxu0 %v618
        %v794 = vpop.f32.mrb[0].mxu0
        %v795 = vadd.f32 %v653, %v794
        %v796 = vpop.f32.mrb[0].mxu0
        %v797 = vadd.f32 %v657, %v796
        %v798 = vpop.f32.mrb[0].mxu0
        %v799 = vadd.f32 %v653, %v798
        %v800 = vpop.f32.mrb[0].mxu0
        %v801 = vadd.f32 %v657, %v800
        %802 = vmatprep.mubr.bf16.mxu0 0
        %803 = vmatmul.mubr.bf16.gmra.mrb[0].mxu0 %v619
        %v804 = vpop.f32.mrb[0].mxu0
        %v805 = vadd.f32 %v653, %v804
        %v806 = vpop.f32.mrb[0].mxu0
        %v807 = vadd.f32 %v657, %v806
        %v808 = vpop.f32.mrb[0].mxu0
        %v809 = vadd.f32 %v653, %v808
        %v810 = vpop.f32.mrb[0].mxu0
        %v811 = vadd.f32 %v657, %v810
        %812 = vmatprep.mubr.bf16.mxu0 0
        %813 = vmatmul.mubr.bf16.gmra.mrb[0].mxu0 %v620
        %v814 = vpop.f32.mrb[0].mxu0
        %v815 = vadd.f32 %v653, %v814
        %v816 = vpop.f32.mrb[0].mxu0
        %v817 = vadd.f32 %v657, %v816
        %v818 = vpop.f32.mrb[0].mxu0
        %v819 = vadd.f32 %v653, %v818
        %v820 = vpop.f32.mrb[0].mxu0
        %v821 = vadd.f32 %v657, %v820
        %822 = vmatprep.mubr.bf16.mxu0 0
        %823 = vmatmul.mubr.bf16.gmra.mrb[0].mxu0 %v621
        %v824 = vpop.f32.mrb[0].mxu0
        %v825 = vadd.f32 %v653, %v824
        %v826 = vpop.f32.mrb[0].mxu0
        %v827 = vadd.f32 %v657, %v826
        %v828 = vpop.f32.mrb[0].mxu0
        %v829 = vadd.f32 %v653, %v828
        %v830 = vpop.f32.mrb[0].mxu0
        %v831 = vadd.f32 %v657, %v830
        %832 = vmatprep.mubr.bf16.mxu0 0
        %833 = vmatmul.mubr.bf16.gmra.mrb[0].mxu0 %v622
        %v834 = vpop.f32.mrb[0].mxu0
        %v835 = vadd.f32 %v653, %v834
        %v836 = vpop.f32.mrb[0].mxu0
        %v837 = vadd.f32 %v657, %v836
        %v838 = vpop.f32.mrb[0].mxu0
        %v839 = vadd.f32 %v653, %v838
        %v840 = vpop.f32.mrb[0].mxu0
        %v841 = vadd.f32 %v657, %v840
        %842 = vmatprep.mubr.bf16.mxu0 0
        %843 = vmatmul.mubr.bf16.gmra.mrb[0].mxu0 %v623
        %v844 = vpop.f32.mrb[0].mxu0
        %v845 = vadd.f32 %v653, %v844
        %v846 = vpop.f32.mrb[0].mxu0
        %v847 = vadd.f32 %v657, %v846
        %v848 = vpop.f32.mrb[0].mxu0
        %v849 = vadd.f32 %v653, %v848
        %v850 = vpop.f32.mrb[0].mxu0
        %v851 = vadd.f32 %v657, %v850
        %852 = vmatprep.mubr.bf16.mxu0 0
        %853 = vmatmul.mubr.bf16.gmra.mrb[0].mxu0 %v624
        %v854 = vpop.f32.mrb[0].mxu0
        %v855 = vadd.f32 %v653, %v854
        %v856 = vpop.f32.mrb[0].mxu0
        %v857 = vadd.f32 %v657, %v856
        %v858 = vpop.f32.mrb[0].mxu0
        %v859 = vadd.f32 %v653, %v858
        %v860 = vpop.f32.mrb[0].mxu0
        %v861 = vadd.f32 %v657, %v860
        %862 = vmatprep.mubr.bf16.mxu0 0
        %863 = vmatmul.mubr.bf16.gmra.mrb[0].mxu0 %v625
        %v864 = vpop.f32.mrb[0].mxu0
        %v865 = vadd.f32 %v653, %v864
        %v866 = vpop.f32.mrb[0].mxu0
        %v867 = vadd.f32 %v657, %v866
        %v868 = vpop.f32.mrb[0].mxu0
        %v869 = vadd.f32 %v653, %v868
        %v870 = vpop.f32.mrb[0].mxu0
        %v871 = vadd.f32 %v657, %v870
        %872 = vmatprep.mubr.bf16.mxu0 0
        %873 = vmatmul.mubr.bf16.gmra.mrb[0].mxu0 %v626
        %v874 = vpop.f32.mrb[0].mxu0
        %v875 = vadd.f32 %v653, %v874
        %v876 = vpop.f32.mrb[0].mxu0
        %v877 = vadd.f32 %v657, %v876
        %v878 = vpop.f32.mrb[0].mxu0
        %v879 = vadd.f32 %v653, %v878
        %v880 = vpop.f32.mrb[0].mxu0
        %v881 = vadd.f32 %v657, %v880
        %882 = vmatprep.mubr.bf16.mxu0 0
        %883 = vmatmul.mubr.bf16.gmra.mrb[0].mxu0 %v627
        %v884 = vpop.f32.mrb[0].mxu0
        %v885 = vadd.f32 %v653, %v884
        %v886 = vpop.f32.mrb[0].mxu0
        %v887 = vadd.f32 %v657, %v886
        %v888 = vpop.f32.mrb[0].mxu0
        %v889 = vadd.f32 %v653, %v888
        %v890 = vpop.f32.mrb[0].mxu0
        %v891 = vadd.f32 %v657, %v890
        %892 = vmatprep.mubr.bf16.mxu0 0
        %893 = vmatmul.mubr.bf16.gmra.mrb[0].mxu0 %v628
        %v894 = vpop.f32.mrb[0].mxu0
        %v895 = vadd.f32 %v653, %v894
        %v896 = vpop.f32.mrb[0].mxu0
        %v897 = vadd.f32 %v657, %v896
        %v898 = vpop.f32.mrb[0].mxu0
        %v899 = vadd.f32 %v653, %v898
        %v900 = vpop.f32.mrb[0].mxu0
        %v901 = vadd.f32 %v657, %v900
        %902 = vmatprep.mubr.bf16.mxu0 0
        %903 = vmatmul.mubr.bf16.gmra.mrb[0].mxu0 %v629
        %v904 = vpop.f32.mrb[0].mxu0
        %v905 = vadd.f32 %v653, %v904
        %v906 = vpop.f32.mrb[0].mxu0
        %v907 = vadd.f32 %v657, %v906
        %v908 = vpop.f32.mrb[0].mxu0
        %v909 = vadd.f32 %v653, %v908
        %v910 = vpop.f32.mrb[0].mxu0
        %v911 = vadd.f32 %v657, %v910
        %912 = vmatprep.mubr.bf16.mxu0 0
        %913 = vmatmul.mubr.bf16.gmra.mrb[0].mxu0 %v630
        %v914 = vpop.f32.mrb[0].mxu0
        %v915 = vadd.f32 %v653, %v914
        %v916 = vpop.f32.mrb[0].mxu0
        %v917 = vadd.f32 %v657, %v916
        %v918 = vpop.f32.mrb[0].mxu0
        %v919 = vadd.f32 %v653, %v918
        %v920 = vpop.f32.mrb[0].mxu0
        %v921 = vadd.f32 %v657, %v920
        %922 = vmatprep.mubr.bf16.mxu0 0
        %923 = vmatmul.mubr.bf16.gmra.mrb[0].mxu0 %v631
        %v924 = vpop.f32.mrb[0].mxu0
        %v925 = vadd.f32 %v653, %v924
        %v926 = vpop.f32.mrb[0].mxu0
        %v927 = vadd.f32 %v657, %v926
        %v928 = vpop.f32.mrb[0].mxu0
        %v929 = vadd.f32 %v653, %v928
        %v930 = vpop.f32.mrb[0].mxu0
        %v931 = vadd.f32 %v657, %v930
        %932 = vdwg.mxu0
        %v933 = vmax.f32 %v775, 0.0
        %v934 = vmax.f32 %v777, 0.0
        %v935 = vmax.f32 %v779, 0.0
        %v936 = vmax.f32 %v781, 0.0
        %v937 = vmax.f32 %v785, 0.0
        %v938 = vmax.f32 %v787, 0.0
        %v939 = vmax.f32 %v789, 0.0
        %v940 = vmax.f32 %v791, 0.0
        %v941 = vmax.f32 %v795, 0.0
        %v942 = vmax.f32 %v797, 0.0
        %v943 = vmax.f32 %v799, 0.0
        %v944 = vmax.f32 %v801, 0.0
        %v945 = vmax.f32 %v805, 0.0
        %v946 = vmax.f32 %v807, 0.0
        %v947 = vmax.f32 %v809, 0.0
        %v948 = vmax.f32 %v811, 0.0
        %v949 = vmax.f32 %v815, 0.0
        %v950 = vmax.f32 %v817, 0.0
        %v951 = vmax.f32 %v819, 0.0
        %v952 = vmax.f32 %v821, 0.0
        %v953 = vmax.f32 %v825, 0.0
        %v954 = vmax.f32 %v827, 0.0
        %v955 = vmax.f32 %v829, 0.0
        %v956 = vmax.f32 %v831, 0.0
        %v957 = vmax.f32 %v835, 0.0
        %v958 = vmax.f32 %v837, 0.0
        %v959 = vmax.f32 %v839, 0.0
        %v960 = vmax.f32 %v841, 0.0
        %v961 = vmax.f32 %v845, 0.0
        %v962 = vmax.f32 %v847, 0.0
        %v963 = vmax.f32 %v849, 0.0
        %v964 = vmax.f32 %v851, 0.0
        %v965 = vmax.f32 %v855, 0.0
        %v966 = vmax.f32 %v857, 0.0
        %v967 = vmax.f32 %v859, 0.0
        %v968 = vmax.f32 %v861, 0.0
        %v969 = vmax.f32 %v865, 0.0
        %v970 = vmax.f32 %v867, 0.0
        %v971 = vmax.f32 %v869, 0.0
        %v972 = vmax.f32 %v871, 0.0
        %v973 = vmax.f32 %v875, 0.0
        %v974 = vmax.f32 %v877, 0.0
        %v975 = vmax.f32 %v879, 0.0
        %v976 = vmax.f32 %v881, 0.0
        %v977 = vmax.f32 %v885, 0.0
        %v978 = vmax.f32 %v887, 0.0
        %v979 = vmax.f32 %v889, 0.0
        %v980 = vmax.f32 %v891, 0.0
        %v981 = vmax.f32 %v895, 0.0
        %v982 = vmax.f32 %v897, 0.0
        %v983 = vmax.f32 %v899, 0.0
        %v984 = vmax.f32 %v901, 0.0
        %v985 = vmax.f32 %v905, 0.0
        %v986 = vmax.f32 %v907, 0.0
        %v987 = vmax.f32 %v909, 0.0
        %v988 = vmax.f32 %v911, 0.0
        %v989 = vmax.f32 %v915, 0.0
        %v990 = vmax.f32 %v917, 0.0
        %v991 = vmax.f32 %v919, 0.0
        %v992 = vmax.f32 %v921, 0.0
        %v993 = vmax.f32 %v925, 0.0
        %v994 = vmax.f32 %v927, 0.0
        %v995 = vmax.f32 %v929, 0.0
        %v996 = vmax.f32 %v931, 0.0
        %v997 = vld [vmem:[%s5] sm:$0x3]
        %v998 = vpack.c.bf16 %v935, %v933
        %v999 = vpack.c.bf16 %v936, %v934
        %v1000 = vpack.c.bf16 %v939, %v937
        %v1001 = vpack.c.bf16 %v940, %v938
        %v1002 = vpack.c.bf16 %v943, %v941
        %v1003 = vpack.c.bf16 %v944, %v942
        %v1004 = vpack.c.bf16 %v947, %v945
        %v1005 = vpack.c.bf16 %v948, %v946
        %v1006 = vpack.c.bf16 %v951, %v949
        %v1007 = vpack.c.bf16 %v952, %v950
        %v1008 = vpack.c.bf16 %v955, %v953
        %v1009 = vpack.c.bf16 %v956, %v954
        %v1010 = vpack.c.bf16 %v959, %v957
        %v1011 = vpack.c.bf16 %v960, %v958
        %v1012 = vpack.c.bf16 %v963, %v961
        %v1013 = vpack.c.bf16 %v964, %v962
        %v1014 = vpack.c.bf16 %v967, %v965
        %v1015 = vpack.c.bf16 %v968, %v966
        %v1016 = vpack.c.bf16 %v971, %v969
        %v1017 = vpack.c.bf16 %v972, %v970
        %v1018 = vpack.c.bf16 %v975, %v973
        %v1019 = vpack.c.bf16 %v976, %v974
        %v1020 = vpack.c.bf16 %v979, %v977
        %v1021 = vpack.c.bf16 %v980, %v978
        %v1022 = vpack.c.bf16 %v983, %v981
        %v1023 = vpack.c.bf16 %v984, %v982
        %v1024 = vpack.c.bf16 %v987, %v985
        %v1025 = vpack.c.bf16 %v988, %v986
        %v1026 = vpack.c.bf16 %v991, %v989
        %v1027 = vpack.c.bf16 %v992, %v990
        %v1028 = vpack.c.bf16 %v995, %v993
        %v1029 = vpack.c.bf16 %v996, %v994
        %v1030 = vld [vmem:[#allocation2] sm:$0x1]
        %1032 = vset.pattern.permute.xlu0 0
        %1033 = vperm.xlu0 %1032, %v1030
        %v1034 = vpop.permute.xlu0 %1033
        %v1036 = vlaneseq
        %v1037 = vshrl.u32 %v1036, 7
        %v1038 = vsub.s32 0, %v1037
        %v1039 = vrot.slane %v1034, %v1038
        %v1042 = vunpack.c.l.s4 1966171168
        %v1043 = vunpack.c.0.s8 %v1042
        %v1044 = vlaneseq
        %v1045 = vshrl.u32 %v1044, 7
        %v1046 = vsub.s32 %v1043, %v1045
        %v1047 = vrot.slane %v997, %v1046
        %v1048 = vcombine.high %v1047, %v1047
        %v1050 = vunpack.c.l.s4 1966171168
        %v1051 = vunpack.c.0.s8 %v1050
        %v1052 = vlaneseq
        %v1053 = vshrl.u32 %v1052, 7
        %v1054 = vsub.s32 %v1051, %v1053
        %v1055 = vrot.slane %v1047, %v1054
        %v1057 = vunpack.c.l.s4 1966171168
        %v1058 = vunpack.c.0.s8 %v1057
        %v1059 = vlaneseq
        %v1060 = vshrl.u32 %v1059, 7
        %v1061 = vsub.s32 %v1058, %v1060
        %v1062 = vrot.slane %v1048, %v1061
        %1065 = vmatprep.subr.bf16.mxu0 %v999
        %1066 = vmatpush1.bf16.xpose.msra.mxu0 %v998
        %1067 = vmatprep.subr.bf16.mxu0 %v1001
        %1068 = vmatpush1.bf16.xpose.msra.mxu0 %v1000
        %1069 = vmatprep.subr.bf16.mxu0 %v1003
        %1070 = vmatpush1.bf16.xpose.msra.mxu0 %v1002
        %1071 = vmatprep.subr.bf16.mxu0 %v1005
        %1072 = vmatpush1.bf16.xpose.msra.mxu0 %v1004
        %1073 = vmatprep.subr.bf16.mxu0 %v1007
        %1074 = vmatpush1.bf16.xpose.msra.mxu0 %v1006
        %1075 = vmatprep.subr.bf16.mxu0 %v1009
        %1076 = vmatpush1.bf16.xpose.msra.mxu0 %v1008
        %1077 = vmatprep.subr.bf16.mxu0 %v1011
        %1078 = vmatpush1.bf16.xpose.msra.mxu0 %v1010
        %1079 = vmatprep.subr.bf16.mxu0 %v1013
        %1080 = vmatpush1.bf16.xpose.msra.mxu0 %v1012
        %1081 = vmatprep.subr.bf16.mxu0 %v1015
        %1082 = vmatpush1.bf16.xpose.msra.mxu0 %v1014
        %1083 = vmatprep.subr.bf16.mxu0 %v1017
        %1084 = vmatpush1.bf16.xpose.msra.mxu0 %v1016
        %1085 = vmatprep.subr.bf16.mxu0 %v1019
        %1086 = vmatpush1.bf16.xpose.msra.mxu0 %v1018
        %1087 = vmatprep.subr.bf16.mxu0 %v1021
        %1088 = vmatpush1.bf16.xpose.msra.mxu0 %v1020
        %1089 = vmatprep.subr.bf16.mxu0 %v1023
        %1090 = vmatpush1.bf16.xpose.msra.mxu0 %v1022
        %1091 = vmatprep.subr.bf16.mxu0 %v1025
        %1092 = vmatpush1.bf16.xpose.msra.mxu0 %v1024
        %1093 = vmatprep.subr.bf16.mxu0 %v1027
        %1094 = vmatpush1.bf16.xpose.msra.mxu0 %v1026
        %1095 = vmatprep.subr.bf16.mxu0 %v1029
        %1096 = vmatpush1.bf16.xpose.msra.mxu0 %v1028
        %1097 = vmatprep.mubr.bf16.mxu0 %v1062
        %1098 = vmatmul.mubr.bf16.gmra.mrb[0].mxu0 %v1055
        %v1099 = vpop.f32.mrb[0].mxu0
        %v1100 = vadd.f32 %v1039, %v1099
        %v1101 = vpop.f32.mrb[0].mxu0
        %v1102 = vadd.f32 %v1039, %v1101
        %v1103 = vpop.f32.mrb[0].mxu0
        %v1104 = vpop.f32.mrb[0].mxu0
        %1105 = vdwg.mxu0
        %v1106 = vsub.f32 0.0, %v1100
        %v1107 = vsub.f32 0.0, %v1102
        %v1108 = vmul.f32 %v1106, 1.442695
        %v1109 = vpow.pop %v1108
        %v1110 = vmul.f32 %v1107, 1.442695
        %v1111 = vpow.pop %v1110
        %v1112 = vadd.f32 %v1109, 1.0
        %v1113 = vadd.f32 %v1111, 1.0
        %v1114 = vrcp.pop %v1112
        %v1115 = vrcp.pop %v1113
        %v1118 = vcombine.low %v1114, %v1115
        %v1120 = vunpack.c.l.s4 1966171168
        %v1121 = vunpack.c.0.s8 %v1120
        %v1122 = vlaneseq
        %v1123 = vshrl.u32 %v1122, 7
        %v1124 = vsub.s32 %v1121, %v1123
        %v1125 = vrot.slane %v1118, %v1124
        %v1127 = vunpack.c.l.s4 1966171168
        %v1128 = vunpack.c.0.s8 %v1127
        %v1129 = vlaneseq
        %v1130 = vshrl.u32 %v1129, 7
        %v1131 = vsub.s32 %v1128, %v1130
        %v1132 = vrot.slane %v1125, %v1131
        %v1134 = vlaneseq
        %vm1135 = vcmp.ge.s32.totalorder %v1134, 0
        %vm1136 = vcmp.lt.s32.totalorder %v1134, 256
        %vm1137 = vmand %vm1135, %vm1136
        %1138 = vst.msk [vmem:[%s286] sm:$0x3] %vm1137, %v1132
        %s1139 = sand.u32 %s183, 1
        %s1140 = scalar_lea.sflag [#allocation4], %s1139
        %s1141 = sand.u32 %s183, 1
        %s1142 = smul.addr %s1141, 2
        %s1143 = scalar_lea.vmem [#allocation3], %s1142
        // Predicated region
        $region49: #{tpu_custom_call.1} parent=47 // pred_check
          %p1144 = pneg %p193
        $region50: #{tpu_custom_call.1} parent=47 // pred_check_branch
          %1146 = sbr.rel (%p1144) target = $region52
        $region51: #{tpu_custom_call.1} parent=47 // pred_region
          %s1147 = smul.u32 2, %s23
          %s1149 = ssub.s32 32, 32
          %1150 = vsyncadd %s1140, %s1149
          %s1151 = smul.addr %s1147, 16
          %s1152 = scalar_lea.hbm %s7, %s1151
          %s1154 = sshll.u32 %s1143, 4
          %s1155 = int_to_ptr.vmem [resolvable:$true] %s1154
          %1157 = dma.vmem_to_hbm [thread:$0]  %s1155, 32, %s1152, %s1140
        $region52: #{tpu_custom_call.1} parent=47 // pred_fallthru
          _
      $region48: #{tpu_custom_call.1} parent=5 // pred_fallthru
        _
      %p1158 = scmp.le.s32.totalorder 2, %s18
      // Predicated region
      $region53: #{tpu_custom_call.1} parent=5 // pred_check
        %p1159 = pneg %p1158
      $region54: #{tpu_custom_call.1} parent=5 // pred_check_branch
        %1161 = sbr.rel (%p1159) target = $region56
      $region55: #{tpu_custom_call.1} parent=5 // pred_region
        %s1162 = ssub.s32 %s18, 2
        // Predicated region
        $region57: #{tpu_custom_call.1} parent=55 // pred_check
          %p1163 = pneg %p199
        $region58: #{tpu_custom_call.1} parent=55 // pred_check_branch
          %1165 = sbr.rel (%p1163) target = $region60
        $region59: #{tpu_custom_call.1} parent=55 // pred_region
          %s1166 = sand.u32 %s184, 1
          %s1167 = scalar_lea.sflag [#allocation4], %s1166
          %s1168 = sand.u32 %s184, 1
          %s1169 = smul.addr %s1168, 2
          %s1170 = scalar_lea.vmem [#allocation3], %s1169
          %1171 = dma.done %s1167, 32
        $region60: #{tpu_custom_call.1} parent=55 // pred_fallthru
          _
      $region56: #{tpu_custom_call.1} parent=5 // pred_fallthru
        _
    $region6: #{tpu_custom_call.1} parent=1 // loop_footer
      %s22 = sadd.s32 1, %s18
    $region7: #{tpu_custom_call.1} parent=1 // loop_footer_branch
      %17 = sbr.rel target = $region3
    $region8: #{tpu_custom_call.1} parent=1 // loop_exit
      _
    %1172 = vsyncpa [#allocation4], 1
    %s1173 = scalar_lea.sflag [#allocation4], 1
    %1174 = vsyncpa %s1173, 1

</llo_original>
